<compile_context>
chip_gen: v6e
topology: v6e:2x2x1
jax: 0.10.0
libtpu: 0.0.40
codegen_flags: <defaults>
</compile_context>

<pallas_src>
import jax
import jax.numpy as jnp
import numpy as np
from jax import lax
from jax.experimental import pallas as pl
from jax.experimental.pallas import tpu as pltpu


def _round_up(x, m):
    return (x + m - 1) // m * m


def _largest_tile(m_pad, quantum, limit):
    """Largest multiple of `quantum` that divides m_pad and is <= limit."""
    units = m_pad // quantum
    for d in range(min(units, max(limit // quantum, 1)), 0, -1):
        if units % d == 0:
            return d * quantum
    return quantum


def _chip_budget():
    """VMEM limit and max row-tile, adapted to the local TPU generation."""
    try:
        cap = int(pltpu.get_tpu_info().vmem_capacity_bytes)
    except Exception:
        cap = 64 * 1024 * 1024          # conservative (v7x-sized) fallback
    vmem_limit = int(min(112 * 1024 * 1024, (cap * 3) // 4))
    tm_max = 2048 if cap >= 96 * 1024 * 1024 else 1024
    return vmem_limit, tm_max


def residual_block_kernel(a_ref, w_ref, b_ref, o_ref):
    # One fused MXU matmul (bf16 in, f32 accumulate) + bias broadcast.
    acc = jnp.dot(a_ref[...], w_ref[...], preferred_element_type=jnp.float32)
    o_ref[...] = (acc + b_ref[...]).astype(o_ref.dtype)


def _im2col_stride2_pad1(x, kh=3, kw=3, stride=2, pad=1):
    # x: (N, C, H, W) -> patches (N*Ho*Wo, C*kh*kw); column order matches
    # torch weight.reshape(Cout, C*kh*kw) (C outermost, then ky, kx).
    N, C, H, W = x.shape
    Ho = (H + 2 * pad - kh) // stride + 1
    Wo = (W + 2 * pad - kw) // stride + 1
    xpad = jnp.pad(x, ((0, 0), (0, 0), (pad, pad), (pad, pad)))
    taps = []
    for ky in range(kh):
        for kx in range(kw):
            taps.append(
                xpad[:, :, ky:ky + stride * Ho:stride, kx:kx + stride * Wo:stride]
            )
    p = jnp.stack(taps, axis=2)              # (N, C, 9, Ho, Wo)
    p = p.transpose(0, 3, 4, 1, 2)           # (N, Ho, Wo, C, 9)
    return p.reshape(N * Ho * Wo, C * kh * kw), Ho, Wo


def residual_block_forward(x, w_block, b_block, w_proj, b_proj):
    """x: (N, Cin, H, W) NCHW.  Returns (N, Cout, Ho, Wo) NCHW."""
    N, Cin, H, W = x.shape
    Cout = w_block.shape[0]

    # ---- fold the projection branch into the centre tap (exact) -----------
    w_fused = w_block.at[:, :, 1, 1].add(w_proj[:, :, 0, 0])   # f32 fold
    b_fused = (b_block + b_proj).astype(jnp.float32)

    # ---- im2col of the (only) conv branch, bf16 operands -------------------
    patches, Ho, Wo = _im2col_stride2_pad1(x.astype(jnp.bfloat16))  # (M, K)
    M = N * Ho * Wo
    K = Cin * 9

    # ---- tight, layout-friendly padding ------------------------------------
    K_pad = _round_up(K, 16)         # bf16 sublane quantum only (NOT 128)
    N_pad = _round_up(Cout, 128)     # lane-dense output stores
    M_pad = _round_up(M, 16)         # bf16 sublane pack for the row tile

    vmem_limit, tm_max = _chip_budget()
    TM = _largest_tile(M_pad, 16, tm_max)    # divides M_pad exactly

    # Single write into the pre-padded GEMM operand (no concat/pad passes).
    a_p = jnp.zeros((M_pad, K_pad), jnp.bfloat16).at[:M, :K].set(patches)
    w_p = jnp.zeros((K_pad, N_pad), jnp.bfloat16).at[:K, :Cout].set(
        w_fused.reshape(Cout, K).T.astype(jnp.bfloat16))
    b_p = jnp.zeros((1, N_pad), jnp.float32).at[:, :Cout].set(
        b_fused.reshape(1, Cout))

    cost = pl.CostEstimate(
        flops=2 * M_pad * K_pad * N_pad,
        transcendentals=0,
        bytes_accessed=(a_p.size * 2 + w_p.size * 2 + b_p.size * 4
                        + M_pad * N_pad * 4),
    )

    out_flat = pl.pallas_call(
        residual_block_kernel,
        out_shape=jax.ShapeDtypeStruct((M_pad, N_pad), jnp.float32),
        grid=(M_pad // TM,),
        in_specs=[
            pl.BlockSpec((TM, K_pad), lambda i: (i, 0)),      # row-tiled activations
            pl.BlockSpec((K_pad, N_pad), lambda i: (0, 0)),   # weights resident
            pl.BlockSpec((1, N_pad), lambda i: (0, 0)),       # bias resident
        ],
        out_specs=pl.BlockSpec((TM, N_pad), lambda i: (i, 0)),
        compiler_params=pltpu.CompilerParams(
            dimension_semantics=("parallel",),
            vmem_limit_bytes=vmem_limit,
        ),
        cost_estimate=cost,
    )(a_p, w_p, b_p)

    out = out_flat[:M, :Cout].reshape(N, Ho, Wo, Cout)
    # TODO(synk): emit NHWC (or bf16) and fuse this transpose into the
    # consumer when integrating; kept to preserve the PyTorch NCHW interface.
    return out.transpose(0, 3, 1, 2)


def _reference(x, w_block, b_block, w_proj, b_proj):
    dn = ("NCHW", "OIHW", "NCHW")
    out = lax.conv_general_dilated(
        x, w_block, window_strides=(2, 2), padding=((1, 1), (1, 1)),
        dimension_numbers=dn,
    ) + b_block[None, :, None, None]
    xp = lax.conv_general_dilated(
        x, w_proj, window_strides=(2, 2), padding="VALID",
        dimension_numbers=dn,
    ) + b_proj[None, :, None, None]
    return xp + out


if __name__ == "__main__":
    key = jax.random.PRNGKey(0)
    k_x, k_wb, k_bb, k_wp, k_bp = jax.random.split(key, 5)

    N, Cin, Cout, H, W = 2, 4, 8, 16, 16
    x = jax.random.normal(k_x, (N, Cin, H, W), dtype=jnp.float32)
    w_block = jax.random.normal(k_wb, (Cout, Cin, 3, 3), dtype=jnp.float32) * 0.1
    b_block = jax.random.normal(k_bb, (Cout,), dtype=jnp.float32) * 0.1
    w_proj = jax.random.normal(k_wp, (Cout, Cin, 1, 1), dtype=jnp.float32) * 0.1
    b_proj = jax.random.normal(k_bp, (Cout,), dtype=jnp.float32) * 0.1

    y = residual_block_forward(x, w_block, b_block, w_proj, b_proj)
    y = jax.block_until_ready(y)

    y_ref = _reference(x, w_block, b_block, w_proj, b_proj)
    # bf16 matmul operands (f32 accumulate) -> looser tolerance than pure f32.
    np.testing.assert_allclose(np.asarray(y), np.asarray(y_ref), rtol=2e-2, atol=2e-2)

    print("KERNEL_OK")
</pallas_src>

<mosaic_0001>
module attributes {stable_mosaic.version = 11 : i64} {
  func.func @residual_block_kernel(%arg0: i32, %arg1: memref<128x48xbf16, #tpu.memory_space<vmem>>, %arg2: memref<48x128xbf16, #tpu.memory_space<vmem>>, %arg3: memref<1x128xf32, #tpu.memory_space<vmem>>, %arg4: memref<128x128xf32, #tpu.memory_space<vmem>>) attributes {dimension_semantics = [#tpu.dimension_semantics<parallel>], iteration_bounds = array<i64: 1>, scalar_prefetch = 0 : i64, scratch_operands = 0 : i64, tpu.core_type = #tpu.core_type<tc>, window_params = [{transform_indices = @transform_0, window_bounds = array<i64: 128, 48>}, {pipeline_mode = #tpu.pipeline_mode<synchronous>, transform_indices = @transform_1, window_bounds = array<i64: 48, 128>}, {pipeline_mode = #tpu.pipeline_mode<synchronous>, transform_indices = @transform_2, window_bounds = array<i64: 1, 128>}, {transform_indices = @transform_3, window_bounds = array<i64: 128, 128>}]} {
    %c0 = arith.constant 0 : index
    %c0_0 = arith.constant 0 : index
    %0 = vector.load %arg1[%c0, %c0_0] : memref<128x48xbf16, #tpu.memory_space<vmem>>, vector<128x48xbf16>
    %c0_1 = arith.constant 0 : index
    %c0_2 = arith.constant 0 : index
    %1 = vector.load %arg2[%c0_1, %c0_2] : memref<48x128xbf16, #tpu.memory_space<vmem>>, vector<48x128xbf16>
    %cst = arith.constant dense<0.000000e+00> : vector<128x128xf32>
    %2 = tpu.matmul %0, %1, %cst {dimension_numbers = #tpu.dot_dimension_numbers<[1], [0], [0], [1], [0, 0, 1, 1], [], []>} : vector<128x48xbf16>, vector<48x128xbf16>, vector<128x128xf32> -> vector<128x128xf32>
    %c0_3 = arith.constant 0 : index
    %c0_4 = arith.constant 0 : index
    %3 = vector.load %arg3[%c0_3, %c0_4] : memref<1x128xf32, #tpu.memory_space<vmem>>, vector<1x128xf32>
    %4 = vector.broadcast %3 : vector<1x128xf32> to vector<128x128xf32>
    %5 = arith.addf %2, %4 : vector<128x128xf32>
    %c0_5 = arith.constant 0 : index
    %c0_6 = arith.constant 0 : index
    %6 = vector.load %arg4[%c0_5, %c0_6] : memref<128x128xf32, #tpu.memory_space<vmem>>, vector<128x128xf32>
    tpu.vector_store %arg4[%c0_5, %c0_6], %5 {strides = array<i32>} : memref<128x128xf32, #tpu.memory_space<vmem>>, vector<128x128xf32>,
    return
  }
  func.func @transform_0(%arg0: i32) -> (i32, i32) {
    %c0_i32 = arith.constant 0 : i32
    %c0_i32_0 = arith.constant 0 : i32
    return %arg0, %c0_i32 : i32, i32
  }
  func.func @transform_1(%arg0: i32) -> (i32, i32) {
    %c0_i32 = arith.constant 0 : i32
    %c0_i32_0 = arith.constant 0 : i32
    %c0_i32_1 = arith.constant 0 : i32
    return %c0_i32, %c0_i32_0 : i32, i32
  }
  func.func @transform_2(%arg0: i32) -> (i32, i32) {
    %c0_i32 = arith.constant 0 : i32
    %c0_i32_0 = arith.constant 0 : i32
    %c0_i32_1 = arith.constant 0 : i32
    return %c0_i32, %c0_i32_0 : i32, i32
  }
  func.func @transform_3(%arg0: i32) -> (i32, i32) {
    %c0_i32 = arith.constant 0 : i32
    %c0_i32_0 = arith.constant 0 : i32
    return %arg0, %c0_i32 : i32, i32
  }
}

</mosaic_0001>

<llo_original>
// kernel: tpu_custom_call.1
$region0: #{tpu_custom_call.1}
  #allocation0 [shape = 'u32[]', space=smem, size = 0x4, offset = 0x4, fixed_abs, tag = 'smem constant byte address 0x4 - core index']
  #allocation1 [shape = 'u32[144,128]{1,0:T(1,128)}', space=vmem, size = 0x12000, scoped, tag = 'internal scratch']
  %s0 = inlined_call_operand.vmem [shape: bf16[128,48], index: 0, kind: input, shape index: {}]
  %s1 = inlined_call_operand.vmem [shape: bf16[48,128], index: 1, kind: input, shape index: {}]
  %s2 = inlined_call_operand.vmem [shape: f32[1,128], index: 2, kind: input, shape index: {}]
  %s3 = inlined_call_operand.hbm [shape: f32[128,128], index: 3, kind: output, shape index: {}]
  %s4 = sld [smem:[#allocation0]]
  $region22: #{tpu_custom_call.1} parent=0
    _
  %s6 = ssub.s32 1, %s4
  %s7 = scalar_select 0, %s6, %s4
  $region1: #{tpu_custom_call.1} parent=0
    #allocation2 [shape = 'u8[65536]{0}', space=vmem, size = 0x10000, scoped, tag = 'output window, operand 0, single buffered']
    #allocation3 [shape = 's32[1]{0}', space=sflag, size = 0x4, scoped, tag = 'scoped memory for tpu_custom_call.1']
    %8 = vsyncpa [#allocation3], 0
    // Predicated region
    $region2: #{tpu_custom_call.1} parent=1 // pred_check
      _
    $region3: #{tpu_custom_call.1} parent=1 // pred_check_branch
      %10 = sbr.rel (0) target = $region5
    $region4: #{tpu_custom_call.1} parent=1 // pred_region
      _
    $region5: #{tpu_custom_call.1} parent=1 // pred_fallthru
      _
    // Predicated region
    $region6: #{tpu_custom_call.1} parent=1 // pred_check
      _
    $region7: #{tpu_custom_call.1} parent=1 // pred_check_branch
      %12 = sbr.rel (0) target = $region9
    $region8: #{tpu_custom_call.1} parent=1 // pred_region
      _
    $region9: #{tpu_custom_call.1} parent=1 // pred_fallthru
      _
    // Predicated region
    $region10: #{tpu_custom_call.1} parent=1 // pred_check
      _
    $region11: #{tpu_custom_call.1} parent=1 // pred_check_branch
      %14 = sbr.rel (0) target = $region13
    $region12: #{tpu_custom_call.1} parent=1 // pred_region
      _
    $region13: #{tpu_custom_call.1} parent=1 // pred_fallthru
      _
    %v16 = vld [vmem:[%s0] sm:$0xf]
    %v17 = vld [vmem:[%s0 + $0x4] sm:$0xf]
    %v18 = vld [vmem:[%s0 + $0x8] sm:$0xf]
    %v19 = vld [vmem:[%s0 + $0xc] sm:$0xf]
    %v20 = vld [vmem:[%s0 + $0x10] sm:$0xf]
    %v21 = vld [vmem:[%s0 + $0x14] sm:$0xf]
    %v22 = vld [vmem:[%s0 + $0x18] sm:$0xf]
    %v23 = vld [vmem:[%s0 + $0x1c] sm:$0xf]
    %v24 = vld [vmem:[%s0 + $0x20] sm:$0xf]
    %v25 = vld [vmem:[%s0 + $0x24] sm:$0xf]
    %v26 = vld [vmem:[%s0 + $0x28] sm:$0xf]
    %v27 = vld [vmem:[%s0 + $0x2c] sm:$0xf]
    %v28 = vld [vmem:[%s0 + $0x30] sm:$0xf]
    %v29 = vld [vmem:[%s0 + $0x34] sm:$0xf]
    %v30 = vld [vmem:[%s0 + $0x38] sm:$0xf]
    %v31 = vld [vmem:[%s0 + $0x3c] sm:$0xf]
    %v32 = vld [vmem:[%s1] sm:$0xf]
    %v33 = vld [vmem:[%s1 + $0x4] sm:$0xf]
    %v34 = vld [vmem:[%s1 + $0x8] sm:$0xf]
    %v35 = vld [vmem:[%s1 + $0xc] sm:$0xf]
    %v36 = vld [vmem:[%s1 + $0x10] sm:$0xf]
    %v37 = vld [vmem:[%s1 + $0x14] sm:$0xf]
    %v38 = vld [vmem:[%s2] sm:$0x1]
    %v40 = vlaneseq
    %v41 = vshrl.u32 %v40, 7
    %v42 = vsub.s32 0, %v41
    %v43 = vrot.slane %v38, %v42
    %v61 = vunpack.c.l.b16 %v16
    %v62 = vunpack.c.l.b16 %v17
    %v63 = vunpack.c.l.b16 %v18
    %v64 = vunpack.c.l.b16 %v19
    %v65 = vunpack.c.l.b16 %v20
    %v66 = vunpack.c.l.b16 %v21
    %v67 = vunpack.c.l.b16 %v22
    %v68 = vunpack.c.l.b16 %v23
    %v69 = vunpack.c.l.b16 %v24
    %v70 = vunpack.c.l.b16 %v25
    %v71 = vunpack.c.l.b16 %v26
    %v72 = vunpack.c.l.b16 %v27
    %v73 = vunpack.c.l.b16 %v28
    %v74 = vunpack.c.l.b16 %v29
    %v75 = vunpack.c.l.b16 %v30
    %v76 = vunpack.c.l.b16 %v31
    %v77 = vpack.c.b16 %v62, %v61
    %v78 = vpack.c.b16 %v64, %v63
    %v79 = vpack.c.b16 %v66, %v65
    %v80 = vpack.c.b16 %v68, %v67
    %v81 = vpack.c.b16 %v70, %v69
    %v82 = vpack.c.b16 %v72, %v71
    %v83 = vpack.c.b16 %v74, %v73
    %v84 = vpack.c.b16 %v76, %v75
    %v91 = vunpack.c.l.b16 %v32
    %v92 = vunpack.c.l.b16 %v33
    %v93 = vunpack.c.l.b16 %v34
    %v94 = vunpack.c.l.b16 %v35
    %v95 = vunpack.c.l.b16 %v36
    %v96 = vunpack.c.l.b16 %v37
    %v97 = vpack.c.b16 %v92, %v91
    %v98 = vpack.c.b16 %v94, %v93
    %v99 = vpack.c.b16 %v96, %v95
    %vm103 = vcmask 392192
    %v105 = vsel %vm103, %v77, 0
    %v108 = vsel %vm103, %v78, 0
    %v111 = vsel %vm103, %v79, 0
    %v114 = vsel %vm103, %v80, 0
    %v117 = vsel %vm103, %v81, 0
    %v120 = vsel %vm103, %v82, 0
    %v123 = vsel %vm103, %v83, 0
    %v126 = vsel %vm103, %v84, 0
    %128 = vmatprep.subr.bf16.mxu0 0
    %129 = vmatpush1.bf16.msra.mxu0 0
    %130 = vmatprep.subr.bf16.mxu0 0
    %131 = vmatpush1.bf16.msra.mxu0 0
    %132 = vmatprep.subr.bf16.mxu0 0
    %133 = vmatpush1.bf16.msra.mxu0 0
    %134 = vmatprep.subr.bf16.mxu0 0
    %135 = vmatpush1.bf16.msra.mxu0 0
    %136 = vmatprep.subr.bf16.mxu0 0
    %137 = vmatpush1.bf16.msra.mxu0 0
    %138 = vmatprep.subr.bf16.mxu0 0
    %139 = vmatpush1.bf16.msra.mxu0 %v99
    %140 = vmatprep.subr.bf16.mxu0 0
    %141 = vmatpush1.bf16.msra.mxu0 %v98
    %142 = vmatprep.subr.bf16.mxu0 0
    %143 = vmatpush1.bf16.msra.mxu0 %v97
    %144 = vmatprep.subr.bf16.mxu0 0
    %145 = vmatpush2.bf16.msra.mxu0 0
    %146 = vmatprep.subr.bf16.mxu0 0
    %147 = vmatpush2.bf16.msra.mxu0 0
    %148 = vmatprep.subr.bf16.mxu0 0
    %149 = vmatpush2.bf16.msra.mxu0 0
    %150 = vmatprep.subr.bf16.mxu0 0
    %151 = vmatpush2.bf16.msra.mxu0 0
    %152 = vmatprep.subr.bf16.mxu0 0
    %153 = vmatpush2.bf16.msra.mxu0 0
    %154 = vmatprep.subr.bf16.mxu0 0
    %155 = vmatpush2.bf16.msra.mxu0 0
    %156 = vmatprep.subr.bf16.mxu0 0
    %157 = vmatpush2.bf16.msra.mxu0 0
    %158 = vmatprep.subr.bf16.mxu0 0
    %159 = vmatpush2.bf16.msra.mxu0 0
    %160 = vmatprep.mubr.bf16.mxu0 0
    %161 = vmatmul.mubr.bf16.gmra.mxu0 %v105
    %v162 = vpop.f32.mrf.mxu0
    %v163 = vadd.f32 %v43, %v162
    %v164 = vpop.f32.mrf.mxu0
    %v165 = vpop.f32.mrf.mxu0
    %v166 = vadd.f32 %v43, %v165
    %v167 = vpop.f32.mrf.mxu0
    %168 = vmatprep.mubr.bf16.mxu0 0
    %169 = vmatmul.mubr.bf16.gmra.mxu0 %v108
    %v170 = vpop.f32.mrf.mxu0
    %v171 = vadd.f32 %v43, %v170
    %v172 = vpop.f32.mrf.mxu0
    %v173 = vpop.f32.mrf.mxu0
    %v174 = vadd.f32 %v43, %v173
    %v175 = vpop.f32.mrf.mxu0
    %176 = vmatprep.mubr.bf16.mxu0 0
    %177 = vmatmul.mubr.bf16.gmra.mxu0 %v111
    %v178 = vpop.f32.mrf.mxu0
    %v179 = vadd.f32 %v43, %v178
    %v180 = vpop.f32.mrf.mxu0
    %v181 = vpop.f32.mrf.mxu0
    %v182 = vadd.f32 %v43, %v181
    %v183 = vpop.f32.mrf.mxu0
    %184 = vmatprep.mubr.bf16.mxu0 0
    %185 = vmatmul.mubr.bf16.gmra.mxu0 %v114
    %v186 = vpop.f32.mrf.mxu0
    %v187 = vadd.f32 %v43, %v186
    %v188 = vpop.f32.mrf.mxu0
    %v189 = vpop.f32.mrf.mxu0
    %v190 = vadd.f32 %v43, %v189
    %v191 = vpop.f32.mrf.mxu0
    %192 = vmatprep.mubr.bf16.mxu0 0
    %193 = vmatmul.mubr.bf16.gmra.mxu0 %v117
    %v194 = vpop.f32.mrf.mxu0
    %v195 = vadd.f32 %v43, %v194
    %v196 = vpop.f32.mrf.mxu0
    %v197 = vpop.f32.mrf.mxu0
    %v198 = vadd.f32 %v43, %v197
    %v199 = vpop.f32.mrf.mxu0
    %200 = vmatprep.mubr.bf16.mxu0 0
    %201 = vmatmul.mubr.bf16.gmra.mxu0 %v120
    %v202 = vpop.f32.mrf.mxu0
    %v203 = vadd.f32 %v43, %v202
    %v204 = vpop.f32.mrf.mxu0
    %v205 = vpop.f32.mrf.mxu0
    %v206 = vadd.f32 %v43, %v205
    %v207 = vpop.f32.mrf.mxu0
    %208 = vmatprep.mubr.bf16.mxu0 0
    %209 = vmatmul.mubr.bf16.gmra.mxu0 %v123
    %v210 = vpop.f32.mrf.mxu0
    %v211 = vadd.f32 %v43, %v210
    %v212 = vpop.f32.mrf.mxu0
    %v213 = vpop.f32.mrf.mxu0
    %v214 = vadd.f32 %v43, %v213
    %v215 = vpop.f32.mrf.mxu0
    %216 = vmatprep.mubr.bf16.mxu0 0
    %217 = vmatmul.mubr.bf16.gmra.mxu0 %v126
    %v218 = vpop.f32.mrf.mxu0
    %v219 = vadd.f32 %v43, %v218
    %v220 = vpop.f32.mrf.mxu0
    %v221 = vpop.f32.mrf.mxu0
    %v222 = vadd.f32 %v43, %v221
    %v223 = vpop.f32.mrf.mxu0
    %224 = vdwg.mxu0
    %225 = vst [vmem:[#allocation2] sm:$0xff] %v163
    %226 = vst [vmem:[#allocation2 + $0x8] sm:$0xff] %v166
    %227 = vst [vmem:[#allocation2 + $0x10] sm:$0xff] %v171
    %228 = vst [vmem:[#allocation2 + $0x18] sm:$0xff] %v174
    %229 = vst [vmem:[#allocation2 + $0x20] sm:$0xff] %v179
    %230 = vst [vmem:[#allocation2 + $0x28] sm:$0xff] %v182
    %231 = vst [vmem:[#allocation2 + $0x30] sm:$0xff] %v187
    %232 = vst [vmem:[#allocation2 + $0x38] sm:$0xff] %v190
    %233 = vst [vmem:[#allocation2 + $0x40] sm:$0xff] %v195
    %234 = vst [vmem:[#allocation2 + $0x48] sm:$0xff] %v198
    %235 = vst [vmem:[#allocation2 + $0x50] sm:$0xff] %v203
    %236 = vst [vmem:[#allocation2 + $0x58] sm:$0xff] %v206
    %237 = vst [vmem:[#allocation2 + $0x60] sm:$0xff] %v211
    %238 = vst [vmem:[#allocation2 + $0x68] sm:$0xff] %v214
    %239 = vst [vmem:[#allocation2 + $0x70] sm:$0xff] %v219
    %240 = vst [vmem:[#allocation2 + $0x78] sm:$0xff] %v222
    // Predicated region
    $region14: #{tpu_custom_call.1} parent=1 // pred_check
      _
    $region15: #{tpu_custom_call.1} parent=1 // pred_check_branch
      %242 = sbr.rel (0) target = $region17
    $region16: #{tpu_custom_call.1} parent=1 // pred_region
      %s244 = ssub.s32 2048, 2048
      %245 = vsyncadd [#allocation3], %s244
      %s246 = sshll.u32 [#allocation2], 4
      %s247 = int_to_ptr.vmem [resolvable:$true] %s246
      %252 = dma.vmem_to_hbm [thread:$0]  %s247, 2048, %s3, [#allocation3], 128, 128, 8
    $region17: #{tpu_custom_call.1} parent=1 // pred_fallthru
      _
    // Predicated region
    $region18: #{tpu_custom_call.1} parent=1 // pred_check
      _
    $region19: #{tpu_custom_call.1} parent=1 // pred_check_branch
      %254 = sbr.rel (0) target = $region21
    $region20: #{tpu_custom_call.1} parent=1 // pred_region
      %255 = dma.done [#allocation3], 2048
    $region21: #{tpu_custom_call.1} parent=1 // pred_fallthru
      _
    %256 = vsyncpa [#allocation3], 1

</llo_original>
